<compile_context>
chip_gen: v5e
topology: v5e:2x2
jax: 0.10.0
libtpu: 0.0.40
codegen_flags: <defaults>
</compile_context>

<pallas_src>
import functools

import jax
import jax.numpy as jnp
from jax.experimental import pallas as pl
from jax.experimental.pallas import tpu as pltpu


# ----------------------------------------------------------------------------
# One-off probe: detect pltpu.roll lowering support and its direction convention.
# ----------------------------------------------------------------------------
_ROLL_MODE = None  # "pull_next" | "jnp" | "concat"


def _roll_probe_kernel(x_ref, o1_ref, o2_ref):
    n = x_ref.shape[0]
    o1_ref[...] = pltpu.roll(x_ref[...], shift=1, axis=0)
    o2_ref[...] = pltpu.roll(x_ref[...], shift=n - 1, axis=0)


def _detect_roll_mode():
    """'pull_next': roll(x,s,0)[r]==x[r+s]; 'jnp': ==x[r-s]; 'concat': roll unusable."""
    global _ROLL_MODE
    if _ROLL_MODE is not None:
        return _ROLL_MODE
    n = 128
    mode = "concat"
    try:
        x = jnp.broadcast_to(jnp.arange(n, dtype=jnp.float32)[:, None], (n, 128))
        o1, o2 = pl.pallas_call(
            _roll_probe_kernel,
            out_shape=(jax.ShapeDtypeStruct((n, 128), jnp.float32),
                       jax.ShapeDtypeStruct((n, 128), jnp.float32)),
        )(x)
        v1 = float(jax.block_until_ready(o1)[0, 0])
        v2 = float(jax.block_until_ready(o2)[0, 0])
        if v1 == 1.0 and v2 == float(n - 1):
            mode = "pull_next"
        elif v1 == float(n - 1) and v2 == 1.0:
            mode = "jnp"
    except Exception:
        mode = "concat"
    _ROLL_MODE = mode
    return mode


def _shift_rows_up(p, k, n_rows, roll_mode):
    """Return q with q[r, :] = p[(r + k) % n_rows, :]  (k static, small)."""
    if k == 0:
        return p
    if roll_mode == "pull_next":
        return pltpu.roll(p, shift=k, axis=0)
    if roll_mode == "jnp":
        return pltpu.roll(p, shift=n_rows - k, axis=0)
    # Fallback: unaligned slice + zero fill (the filled rows are masked / zero-weight anyway).
    return jnp.concatenate([p[k:, :], jnp.zeros((k, p.shape[1]), p.dtype)], axis=0)


# ----------------------------------------------------------------------------
# Fused kernel: conv(all filter sizes) + bias + ReLU + max-pool-over-time + FC
# ----------------------------------------------------------------------------
def _bert_cnn_kernel(emb_ref, w_ref, b_ref, mask_ref, fcw_ref, fcb_ref, out_ref,
                     *, fs_max, seq_len, roll_mode):
    # emb_ref : [tb, S, H]            (bf16)
    # w_ref   : [n_pairs, H, 2*F_pad] (bf16)  taps (2j, 2j+1) packed side-by-side along lanes
    # b_ref   : [1, F_pad]  (f32)     mask_ref: [S, F_pad] (f32, 0/1 validity)
    # fcw_ref : [F_pad, O_pad] (f32)  fcb_ref : [1, O_pad] (f32)
    # out_ref : [tb, O_pad] (f32)
    tb, _, hidden = emb_ref.shape
    n_pairs = w_ref.shape[0]
    f_pad = w_ref.shape[2] // 2
    n_rows = tb * seq_len

    # Flatten batch*seq into the MXU M dimension.
    emb2d = emb_ref[...].reshape(n_rows, hidden)

    # Pair 0 (taps 0 and 1).  Each matmul is 2*F_pad (>=256) wide to fill the 256-lane MXU.
    p = jnp.dot(emb2d, w_ref[0], preferred_element_type=jnp.float32)
    acc = p[:, :f_pad] + b_ref[...]                                   # tap 0 + conv bias
    if fs_max > 1:
        acc = acc + _shift_rows_up(p[:, f_pad:], 1, n_rows, roll_mode)

    # Remaining tap pairs.  Rows pulled across sample / wrap boundaries by the shift land only
    # in positions that are masked below (tap k matters only when fs > k, and then l >= S - k
    # is an invalid conv position) or hit exact zero-weight taps of shorter filters.
    for j in range(1, n_pairs):
        p = jnp.dot(emb2d, w_ref[j], preferred_element_type=jnp.float32)
        k0 = 2 * j
        acc = acc + _shift_rows_up(p[:, :f_pad], k0, n_rows, roll_mode)
        if k0 + 1 < fs_max:
            acc = acc + _shift_rows_up(p[:, f_pad:], k0 + 1, n_rows, roll_mode)

    # ReLU, then exact multiplicative validity mask (post-ReLU values are >= 0, so zeroing
    # invalid positions cannot change the max; build_fused_params asserts S >= fs).
    conved = jnp.maximum(acc, 0.0).reshape(tb, seq_len, f_pad)
    pooled = jnp.max(conved * mask_ref[...][None, :, :], axis=1)      # [tb, F_pad]

    # Fused fully-connected epilogue (lane-dense padded output, sliced in the wrapper).
    out_ref[...] = (jnp.dot(pooled, fcw_ref[...], preferred_element_type=jnp.float32)
                    + fcb_ref[...])


# ----------------------------------------------------------------------------
# Wrapper: VMEM-aware tiling, batch padding, single pallas_call
# ----------------------------------------------------------------------------
def _vmem_limit_bytes():
    try:
        cap = int(pltpu.get_tpu_info().vmem_capacity_bytes)
    except Exception:
        return 32 * 1024 * 1024                      # safe default on every generation
    # Leave headroom for Mosaic-internal scratch; stays well under physical VMEM.
    return max(16 * 1024 * 1024, min(cap * 3 // 4, 100 * 1024 * 1024))


def _estimate_vmem(tb, seq_len, hidden, f_pad, o_pad, n_pairs):
    n_rows = tb * seq_len
    emb = 2 * tb * seq_len * hidden * 2               # bf16 embedding block, double-buffered
    w = 2 * n_pairs * hidden * 2 * f_pad * 2          # bf16 paired weights, 2 buffers
    pair = n_rows * 2 * f_pad * 4                     # per-pair f32 matmul result
    accs = 2 * n_rows * f_pad * 4                     # accumulator + rolled temporary
    pool = tb * seq_len * f_pad * 4                   # conved / masked
    misc = seq_len * f_pad * 4 + 2 * f_pad * o_pad * 4 + 4 * tb * o_pad * 4
    return emb + w + pair + accs + pool + misc


def bert_cnn_pallas(embedded, fused):
    """embedded: [B, S, H] activations; fused: dict from build_fused_params."""
    embedded = embedded.astype(jnp.bfloat16)
    B, S, H = embedded.shape
    w = fused["w"]
    n_pairs, _, f2 = w.shape
    f_pad = f2 // 2
    o_pad = fused["fc_w"].shape[1]
    fs_max = fused["fs_max"]

    # Pad batch to a multiple of 8: keeps 8+ row tiles, pipelining and the parallel grid
    # for any B (no whole-batch fallback block that blows scoped VMEM at real sizes).
    b_pad = 8 * pl.cdiv(B, 8)
    if b_pad != B:
        embedded = jnp.pad(embedded, ((0, b_pad - B), (0, 0), (0, 0)))

    vmem_limit = _vmem_limit_bytes()
    tb = 8
    for cand in (32, 16, 8):
        if b_pad % cand == 0 and \
                _estimate_vmem(cand, S, H, f_pad, o_pad, n_pairs) <= int(vmem_limit * 0.7):
            tb = cand
            break
    grid = (b_pad // tb,)

    roll_mode = _detect_roll_mode()
    kernel = functools.partial(_bert_cnn_kernel, fs_max=fs_max, seq_len=S,
                               roll_mode=roll_mode)
    # NOTE: constant operands (w/b/mask/fc) have constant index_maps, so they are DMA'd once.
    out = pl.pallas_call(
        kernel,
        out_shape=jax.ShapeDtypeStruct((b_pad, o_pad), jnp.float32),
        grid=grid,
        in_specs=[
            pl.BlockSpec((tb, S, H), lambda i: (i, 0, 0)),           # embeddings (tiled on B)
            pl.BlockSpec((n_pairs, H, f2), lambda i: (0, 0, 0)),     # paired conv weights
            pl.BlockSpec((1, f_pad), lambda i: (0, 0)),              # fused conv bias
            pl.BlockSpec((S, f_pad), lambda i: (0, 0)),              # 0/1 validity mask
            pl.BlockSpec((f_pad, o_pad), lambda i: (0, 0)),          # padded FC weight
            pl.BlockSpec((1, o_pad), lambda i: (0, 0)),              # padded FC bias
        ],
        out_specs=pl.BlockSpec((tb, o_pad), lambda i: (i, 0)),
        compiler_params=pltpu.CompilerParams(
            dimension_semantics=("parallel",),
            vmem_limit_bytes=vmem_limit,
        ),
    )(embedded, w, fused["b"], fused["mask"], fused["fc_w"], fused["fc_b"])
    return out[:B, :fused["output_dim"]]


# ----------------------------------------------------------------------------
# Host-side fusion of the per-filter-size parameters (done once at setup time)
# ----------------------------------------------------------------------------
def build_fused_params(convs, fc_w, fc_b, seq_len, output_dim):
    n_filters = convs[0][0].shape[2]
    hidden = convs[0][0].shape[1]
    fs_list = [w.shape[0] for (w, _) in convs]
    fs_max = max(fs_list)
    for fs in fs_list:
        if seq_len < fs:
            raise ValueError(f"seq_len={seq_len} must be >= filter size {fs}")
    f_total = len(convs) * n_filters
    f_pad = 128 * pl.cdiv(f_total, 128)
    o_pad = 128 * pl.cdiv(output_dim, 128)

    # Per-tap weights, zero-padded to fs_max taps and f_pad output columns.
    w_taps = jnp.zeros((fs_max, hidden, f_pad), jnp.bfloat16)
    b_fused = jnp.zeros((1, f_pad), jnp.float32)
    col_fs = jnp.ones((f_pad,), jnp.int32)   # padded columns behave like fs=1 (pool to 0)
    for g, (w, b) in enumerate(convs):
        fs = w.shape[0]
        c0 = g * n_filters
        w_taps = w_taps.at[:fs, :, c0:c0 + n_filters].set(w.astype(jnp.bfloat16))
        b_fused = b_fused.at[0, c0:c0 + n_filters].set(b.astype(jnp.float32))
        col_fs = col_fs.at[c0:c0 + n_filters].set(fs)

    # Pack taps (2j, 2j+1) side-by-side along lanes -> [n_pairs, H, 2*F_pad] so every matmul
    # fills a 256-lane MXU (v6e/v7x) instead of running at N=128.
    n_pairs = (fs_max + 1) // 2
    w_pairs = jnp.zeros((n_pairs, hidden, 2 * f_pad), jnp.bfloat16)
    w_pairs = w_pairs.at[:, :, :f_pad].set(w_taps[0::2])
    w_pairs = w_pairs.at[:fs_max // 2, :, f_pad:].set(w_taps[1::2])

    # 0/1 validity mask: position l is a valid conv output for column c iff l < S - fs_c + 1.
    pos = jnp.arange(seq_len)[:, None]
    mask = (pos < (seq_len - col_fs[None, :] + 1)).astype(jnp.float32)

    fc_w_pad = jnp.zeros((f_pad, o_pad), jnp.float32)
    fc_w_pad = fc_w_pad.at[:f_total, :output_dim].set(fc_w.astype(jnp.float32))
    fc_b_pad = jnp.zeros((1, o_pad), jnp.float32)
    fc_b_pad = fc_b_pad.at[0, :output_dim].set(fc_b.astype(jnp.float32))

    return {"w": w_pairs, "b": b_fused, "mask": mask,
            "fc_w": fc_w_pad, "fc_b": fc_b_pad,
            "output_dim": output_dim, "fs_max": fs_max}


# ----------------------------------------------------------------------------
# Pure-JAX reference (f32 math on the same bf16-quantized parameters)
# ----------------------------------------------------------------------------
def reference_forward(text, emb_table, convs, fc_w, fc_b):
    emb = emb_table.astype(jnp.float32)[text]            # [B, S, H]
    B, S, H = emb.shape
    pooled = []
    for (w, b) in convs:
        fs = w.shape[0]
        L = S - fs + 1
        wf = w.astype(jnp.float32)
        acc = jnp.zeros((B, L, wf.shape[2]), jnp.float32)
        for k in range(fs):
            acc = acc + jnp.einsum("bld,df->blf", emb[:, k:k + L, :], wf[k])
        conved = jnp.maximum(acc + b.astype(jnp.float32)[None, None, :], 0.0)
        pooled.append(jnp.max(conved, axis=1))
    cat = jnp.concatenate(pooled, axis=1)
    return cat @ fc_w.astype(jnp.float32) + fc_b.astype(jnp.float32)[None, :]


if __name__ == "__main__":
    # Small, module-consistent config
    batch = 2
    seq_len = 16
    hidden = 32          # bert hidden_size (embedding_dim)
    vocab = 50
    n_filters = 4
    filter_sizes = (2, 3, 4)
    output_dim = 3

    key = jax.random.PRNGKey(0)
    keys = jax.random.split(key, 4 + 2 * len(filter_sizes))
    k_emb, k_text, k_fcw, k_fcb = keys[:4]
    k_convs = keys[4:]

    emb_table = (jax.random.normal(k_emb, (vocab, hidden), jnp.float32) * 0.1
                 ).astype(jnp.bfloat16)
    text = jax.random.randint(k_text, (batch, seq_len), 0, vocab)

    convs = []
    for i, fs in enumerate(filter_sizes):
        w = (jax.random.normal(k_convs[2 * i], (fs, hidden, n_filters), jnp.float32) * 0.1
             ).astype(jnp.bfloat16)
        b = jax.random.normal(k_convs[2 * i + 1], (n_filters,), jnp.float32) * 0.1
        convs.append((w, b))

    concat_dim = len(filter_sizes) * n_filters
    fc_w = jax.random.normal(k_fcw, (concat_dim, output_dim), jnp.float32) * 0.1
    fc_b = jax.random.normal(k_fcb, (output_dim,), jnp.float32) * 0.1

    fused = build_fused_params(convs, fc_w, fc_b, seq_len, output_dim)

    # "bert" stand-in: deterministic embedding lookup -> [B, S, H] bf16 activations.
    embedded = emb_table[text]

    out = bert_cnn_pallas(embedded, fused)
    out = jax.block_until_ready(out)

    ref = reference_forward(text, emb_table, convs, fc_w, fc_b)
    assert out.shape == (batch, output_dim)
    assert jnp.allclose(out, ref, atol=1e-3, rtol=1e-3), (out, ref)

    print("KERNEL_OK")
</pallas_src>

<mosaic_0001>
module attributes {stable_mosaic.version = 11 : i64} {
  func.func @_roll_probe_kernel(%arg0: memref<128x128xf32, #tpu.memory_space<vmem>>, %arg1: memref<128x128xf32, #tpu.memory_space<vmem>>, %arg2: memref<128x128xf32, #tpu.memory_space<vmem>>) attributes {dimension_semantics = [], scalar_prefetch = 0 : i64, scratch_operands = 0 : i64, tpu.core_type = #tpu.core_type<tc>} {
    %c0 = arith.constant 0 : index
    %c0_0 = arith.constant 0 : index
    %0 = vector.load %arg0[%c0, %c0_0] : memref<128x128xf32, #tpu.memory_space<vmem>>, vector<128x128xf32>
    %c1_i32 = arith.constant 1 : i32
    %1 = tpu.dynamic_rotate %0 by %c1_i32 dim 0 : vector<128x128xf32>, i32 -> vector<128x128xf32>
    %c0_1 = arith.constant 0 : index
    %c0_2 = arith.constant 0 : index
    %2 = vector.load %arg1[%c0_1, %c0_2] : memref<128x128xf32, #tpu.memory_space<vmem>>, vector<128x128xf32>
    tpu.vector_store %arg1[%c0_1, %c0_2], %1 {strides = array<i32>} : memref<128x128xf32, #tpu.memory_space<vmem>>, vector<128x128xf32>,
    %c0_3 = arith.constant 0 : index
    %c0_4 = arith.constant 0 : index
    %3 = vector.load %arg0[%c0_3, %c0_4] : memref<128x128xf32, #tpu.memory_space<vmem>>, vector<128x128xf32>
    %c127_i32 = arith.constant 127 : i32
    %4 = tpu.dynamic_rotate %3 by %c127_i32 dim 0 : vector<128x128xf32>, i32 -> vector<128x128xf32>
    %c0_5 = arith.constant 0 : index
    %c0_6 = arith.constant 0 : index
    %5 = vector.load %arg2[%c0_5, %c0_6] : memref<128x128xf32, #tpu.memory_space<vmem>>, vector<128x128xf32>
    tpu.vector_store %arg2[%c0_5, %c0_6], %4 {strides = array<i32>} : memref<128x128xf32, #tpu.memory_space<vmem>>, vector<128x128xf32>,
    return
  }
}

module attributes {stable_mosaic.version = 11 : i64} {
  func.func @_bert_cnn_kernel(%arg0: i32, %arg1: memref<8x16x32xbf16, #tpu.memory_space<vmem>>, %arg2: memref<2x32x256xbf16, #tpu.memory_space<vmem>>, %arg3: memref<1x128xf32, #tpu.memory_space<vmem>>, %arg4: memref<16x128xf32, #tpu.memory_space<vmem>>, %arg5: memref<128x128xf32, #tpu.memory_space<vmem>>, %arg6: memref<1x128xf32, #tpu.memory_space<vmem>>, %arg7: memref<8x128xf32, #tpu.memory_space<vmem>>) attributes {dimension_semantics = [#tpu.dimension_semantics<parallel>], iteration_bounds = array<i64: 1>, scalar_prefetch = 0 : i64, scratch_operands = 0 : i64, tpu.core_type = #tpu.core_type<tc>, window_params = [{transform_indices = @transform_0, window_bounds = array<i64: 8, 16, 32>}, {pipeline_mode = #tpu.pipeline_mode<synchronous>, transform_indices = @transform_1, window_bounds = array<i64: 2, 32, 256>}, {pipeline_mode = #tpu.pipeline_mode<synchronous>, transform_indices = @transform_2, window_bounds = array<i64: 1, 128>}, {pipeline_mode = #tpu.pipeline_mode<synchronous>, transform_indices = @transform_3, window_bounds = array<i64: 16, 128>}, {pipeline_mode = #tpu.pipeline_mode<synchronous>, transform_indices = @transform_4, window_bounds = array<i64: 128, 128>}, {pipeline_mode = #tpu.pipeline_mode<synchronous>, transform_indices = @transform_5, window_bounds = array<i64: 1, 128>}, {transform_indices = @transform_6, window_bounds = array<i64: 8, 128>}]} {
    %c0 = arith.constant 0 : index
    %c0_0 = arith.constant 0 : index
    %c0_1 = arith.constant 0 : index
    %0 = vector.load %arg1[%c0, %c0_0, %c0_1] : memref<8x16x32xbf16, #tpu.memory_space<vmem>>, vector<8x16x32xbf16>
    %1 = vector.shape_cast %0 : vector<8x16x32xbf16> to vector<128x32xbf16>
    %c0_2 = arith.constant 0 : index
    %c0_3 = arith.constant 0 : index
    %c0_4 = arith.constant 0 : index
    %2 = vector.load %arg2[%c0_2, %c0_3, %c0_4] : memref<2x32x256xbf16, #tpu.memory_space<vmem>>, vector<1x32x256xbf16>
    %3 = vector.shape_cast %2 : vector<1x32x256xbf16> to vector<32x256xbf16>
    %cst = arith.constant dense<0.000000e+00> : vector<128x256xf32>
    %4 = tpu.matmul %1, %3, %cst {dimension_numbers = #tpu.dot_dimension_numbers<[1], [0], [0], [1], [0, 0, 1, 1], [], []>} : vector<128x32xbf16>, vector<32x256xbf16>, vector<128x256xf32> -> vector<128x256xf32>
    %5 = vector.extract_strided_slice %4 {offsets = [0, 0], sizes = [128, 128], strides = [1, 1]} : vector<128x256xf32> to vector<128x128xf32>
    %c0_5 = arith.constant 0 : index
    %c0_6 = arith.constant 0 : index
    %6 = vector.load %arg3[%c0_5, %c0_6] : memref<1x128xf32, #tpu.memory_space<vmem>>, vector<1x128xf32>
    %7 = vector.broadcast %6 : vector<1x128xf32> to vector<128x128xf32>
    %8 = arith.addf %5, %7 : vector<128x128xf32>
    %9 = vector.extract_strided_slice %4 {offsets = [0, 128], sizes = [128, 128], strides = [1, 1]} : vector<128x256xf32> to vector<128x128xf32>
    %10 = vector.extract_strided_slice %9 {offsets = [1, 0], sizes = [127, 128], strides = [1, 1]} : vector<128x128xf32> to vector<127x128xf32>
    %cst_7 = arith.constant 0.000000e+00 : f32
    %11 = vector.broadcast %cst_7 : f32 to vector<1x128xf32>
    %12 = tpu.concatenate %10, %11 in 0 : vector<127x128xf32>, vector<1x128xf32> -> vector<128x128xf32>
    %13 = arith.addf %8, %12 : vector<128x128xf32>
    %c1 = arith.constant 1 : index
    %c0_8 = arith.constant 0 : index
    %c0_9 = arith.constant 0 : index
    %14 = vector.load %arg2[%c1, %c0_8, %c0_9] : memref<2x32x256xbf16, #tpu.memory_space<vmem>>, vector<1x32x256xbf16>
    %15 = vector.shape_cast %14 : vector<1x32x256xbf16> to vector<32x256xbf16>
    %cst_10 = arith.constant dense<0.000000e+00> : vector<128x256xf32>
    %16 = tpu.matmul %1, %15, %cst_10 {dimension_numbers = #tpu.dot_dimension_numbers<[1], [0], [0], [1], [0, 0, 1, 1], [], []>} : vector<128x32xbf16>, vector<32x256xbf16>, vector<128x256xf32> -> vector<128x256xf32>
    %17 = vector.extract_strided_slice %16 {offsets = [0, 0], sizes = [128, 128], strides = [1, 1]} : vector<128x256xf32> to vector<128x128xf32>
    %18 = vector.extract_strided_slice %17 {offsets = [2, 0], sizes = [126, 128], strides = [1, 1]} : vector<128x128xf32> to vector<126x128xf32>
    %cst_11 = arith.constant 0.000000e+00 : f32
    %19 = vector.broadcast %cst_11 : f32 to vector<2x128xf32>
    %20 = tpu.concatenate %18, %19 in 0 : vector<126x128xf32>, vector<2x128xf32> -> vector<128x128xf32>
    %21 = arith.addf %13, %20 : vector<128x128xf32>
    %22 = vector.extract_strided_slice %16 {offsets = [0, 128], sizes = [128, 128], strides = [1, 1]} : vector<128x256xf32> to vector<128x128xf32>
    %23 = vector.extract_strided_slice %22 {offsets = [3, 0], sizes = [125, 128], strides = [1, 1]} : vector<128x128xf32> to vector<125x128xf32>
    %cst_12 = arith.constant 0.000000e+00 : f32
    %24 = vector.broadcast %cst_12 : f32 to vector<3x128xf32>
    %25 = tpu.concatenate %23, %24 in 0 : vector<125x128xf32>, vector<3x128xf32> -> vector<128x128xf32>
    %26 = arith.addf %21, %25 : vector<128x128xf32>
    %cst_13 = arith.constant 0.000000e+00 : f32
    %27 = vector.broadcast %cst_13 : f32 to vector<128x128xf32>
    %28 = arith.maximumf %26, %27 : vector<128x128xf32>
    %29 = vector.shape_cast %28 : vector<128x128xf32> to vector<8x16x128xf32>
    %c0_14 = arith.constant 0 : index
    %c0_15 = arith.constant 0 : index
    %30 = vector.load %arg4[%c0_14, %c0_15] : memref<16x128xf32, #tpu.memory_space<vmem>>, vector<16x128xf32>
    %31 = vector.shape_cast %30 : vector<16x128xf32> to vector<1x16x128xf32>
    %32 = vector.broadcast %31 : vector<1x16x128xf32> to vector<8x16x128xf32>
    %33 = arith.mulf %29, %32 : vector<8x16x128xf32>
    %cst_16 = arith.constant dense<0xFF800000> : vector<8x128xf32>
    %34 = vector.multi_reduction <maximumf>, %33, %cst_16 [1] : vector<8x16x128xf32> to vector<8x128xf32>
    %c0_17 = arith.constant 0 : index
    %c0_18 = arith.constant 0 : index
    %35 = vector.load %arg5[%c0_17, %c0_18] : memref<128x128xf32, #tpu.memory_space<vmem>>, vector<128x128xf32>
    %cst_19 = arith.constant dense<0.000000e+00> : vector<8x128xf32>
    %36 = tpu.matmul %34, %35, %cst_19 {dimension_numbers = #tpu.dot_dimension_numbers<[1], [0], [0], [1], [0, 0, 1, 1], [], []>} : vector<8x128xf32>, vector<128x128xf32>, vector<8x128xf32> -> vector<8x128xf32>
    %c0_20 = arith.constant 0 : index
    %c0_21 = arith.constant 0 : index
    %37 = vector.load %arg6[%c0_20, %c0_21] : memref<1x128xf32, #tpu.memory_space<vmem>>, vector<1x128xf32>
    %38 = vector.broadcast %37 : vector<1x128xf32> to vector<8x128xf32>
    %39 = arith.addf %36, %38 : vector<8x128xf32>
    %c0_22 = arith.constant 0 : index
    %c0_23 = arith.constant 0 : index
    %40 = vector.load %arg7[%c0_22, %c0_23] : memref<8x128xf32, #tpu.memory_space<vmem>>, vector<8x128xf32>
    tpu.vector_store %arg7[%c0_22, %c0_23], %39 {strides = array<i32>} : memref<8x128xf32, #tpu.memory_space<vmem>>, vector<8x128xf32>,
    return
  }
  func.func @transform_0(%arg0: i32) -> (i32, i32, i32) {
    %c0_i32 = arith.constant 0 : i32
    %c0_i32_0 = arith.constant 0 : i32
    %c0_i32_1 = arith.constant 0 : i32
    return %arg0, %c0_i32, %c0_i32_0 : i32, i32, i32
  }
  func.func @transform_1(%arg0: i32) -> (i32, i32, i32) {
    %c0_i32 = arith.constant 0 : i32
    %c0_i32_0 = arith.constant 0 : i32
    %c0_i32_1 = arith.constant 0 : i32
    %c0_i32_2 = arith.constant 0 : i32
    return %c0_i32, %c0_i32_0, %c0_i32_1 : i32, i32, i32
  }
  func.func @transform_2(%arg0: i32) -> (i32, i32) {
    %c0_i32 = arith.constant 0 : i32
    %c0_i32_0 = arith.constant 0 : i32
    %c0_i32_1 = arith.constant 0 : i32
    return %c0_i32, %c0_i32_0 : i32, i32
  }
  func.func @transform_3(%arg0: i32) -> (i32, i32) {
    %c0_i32 = arith.constant 0 : i32
    %c0_i32_0 = arith.constant 0 : i32
    %c0_i32_1 = arith.constant 0 : i32
    return %c0_i32, %c0_i32_0 : i32, i32
  }
  func.func @transform_4(%arg0: i32) -> (i32, i32) {
    %c0_i32 = arith.constant 0 : i32
    %c0_i32_0 = arith.constant 0 : i32
    %c0_i32_1 = arith.constant 0 : i32
    return %c0_i32, %c0_i32_0 : i32, i32
  }
  func.func @transform_5(%arg0: i32) -> (i32, i32) {
    %c0_i32 = arith.constant 0 : i32
    %c0_i32_0 = arith.constant 0 : i32
    %c0_i32_1 = arith.constant 0 : i32
    return %c0_i32, %c0_i32_0 : i32, i32
  }
  func.func @transform_6(%arg0: i32) -> (i32, i32) {
    %c0_i32 = arith.constant 0 : i32
    %c0_i32_0 = arith.constant 0 : i32
    return %arg0, %c0_i32 : i32, i32
  }
}

</mosaic_0001>

<llo_original>
// kernel: tpu_custom_call.1
$region0: #{tpu_custom_call.1}
  #allocation0 [shape = 'u32[]', space=smem, size = 0x4, offset = 0x4, fixed_abs, tag = 'smem constant byte address 0x4 - core index']
  #allocation1 [shape = 'u32[72,128]{1,0:T(1,128)}', space=vmem, size = 0x9000, scoped, tag = 'internal scratch']
  %s0 = inlined_call_operand.hbm [shape: f32[128,128], index: 0, kind: input, shape index: {}]
  %s1 = inlined_call_operand.hbm [shape: f32[128,128], index: 1, kind: output, shape index: {0}]
  %s2 = inlined_call_operand.hbm [shape: f32[128,128], index: 2, kind: output, shape index: {1}]
  %3 = xla_tuple %s1, %s2
  %s4 = sld [smem:[#allocation0]]
  $region26: #{tpu_custom_call.1} parent=0
    _
  %s6 = ssub.s32 1, %s4
  %s7 = scalar_select 0, %s6, %s4
  $region1: #{tpu_custom_call.1} parent=0
    #allocation2 [shape = 'u8[65536]{0}', space=vmem, size = 0x10000, scoped, tag = 'input window, operand 0, single buffered']
    #allocation3 [shape = 's32[1]{0}', space=sflag, size = 0x4, scoped, tag = 'scoped memory for tpu_custom_call.1']
    #allocation4 [shape = 's32[1]{0}', space=sflag, size = 0x4, scoped, tag = 'scoped memory for tpu_custom_call.1']
    #allocation5 [shape = 'u8[65536]{0}', space=vmem, size = 0x10000, scoped, tag = 'output window, operand 0, single buffered']
    #allocation6 [shape = 'u8[65536]{0}', space=vmem, size = 0x10000, scoped, tag = 'output window, operand 1, single buffered']
    #allocation7 [shape = 's32[1]{0}', space=sflag, size = 0x4, scoped, tag = 'scoped memory for tpu_custom_call.1']
    %8 = vsyncpa [#allocation3], 0
    %9 = vsyncpa [#allocation4], 0
    %10 = vsyncpa [#allocation7], 0
    // Predicated region
    $region2: #{tpu_custom_call.1} parent=1 // pred_check
      _
    $region3: #{tpu_custom_call.1} parent=1 // pred_check_branch
      %12 = sbr.rel (0) target = $region5
    $region4: #{tpu_custom_call.1} parent=1 // pred_region
      %14 = vsyncadd [#allocation3], 0
      %s15 = sshll.u32 %s0, 4
      %s16 = int_to_ptr.hbm [resolvable:$true] %s15
      %s17 = sshll.u32 [#allocation2], 4
      %s18 = int_to_ptr.vmem [resolvable:$true] %s17
      %23 = dma.hbm_to_vmem [thread:$0]  %s16, 2048, %s18, [#allocation3], 128, 128, 8
    $region5: #{tpu_custom_call.1} parent=1 // pred_fallthru
      _
    // Predicated region
    $region6: #{tpu_custom_call.1} parent=1 // pred_check
      _
    $region7: #{tpu_custom_call.1} parent=1 // pred_check_branch
      %25 = sbr.rel (0) target = $region9
    $region8: #{tpu_custom_call.1} parent=1 // pred_region
      %27 = dma.done [#allocation3], 2048
    $region9: #{tpu_custom_call.1} parent=1 // pred_fallthru
      _
    %v28 = vld [vmem:[#allocation2] sm:$0xff]
    %v29 = vld [vmem:[#allocation2 + $0x8] sm:$0xff]
    %v30 = vld [vmem:[#allocation2 + $0x10] sm:$0xff]
    %v31 = vld [vmem:[#allocation2 + $0x18] sm:$0xff]
    %v32 = vld [vmem:[#allocation2 + $0x20] sm:$0xff]
    %v33 = vld [vmem:[#allocation2 + $0x28] sm:$0xff]
    %v34 = vld [vmem:[#allocation2 + $0x30] sm:$0xff]
    %v35 = vld [vmem:[#allocation2 + $0x38] sm:$0xff]
    %v36 = vld [vmem:[#allocation2 + $0x40] sm:$0xff]
    %v37 = vld [vmem:[#allocation2 + $0x48] sm:$0xff]
    %v38 = vld [vmem:[#allocation2 + $0x50] sm:$0xff]
    %v39 = vld [vmem:[#allocation2 + $0x58] sm:$0xff]
    %v40 = vld [vmem:[#allocation2 + $0x60] sm:$0xff]
    %v41 = vld [vmem:[#allocation2 + $0x68] sm:$0xff]
    %v42 = vld [vmem:[#allocation2 + $0x70] sm:$0xff]
    %v43 = vld [vmem:[#allocation2 + $0x78] sm:$0xff]
    %v44 = vrot.slane %v28, 7
    %v45 = vrot.slane %v29, 7
    %v46 = vrot.slane %v30, 7
    %v47 = vrot.slane %v31, 7
    %v48 = vrot.slane %v32, 7
    %v49 = vrot.slane %v33, 7
    %v50 = vrot.slane %v34, 7
    %v51 = vrot.slane %v35, 7
    %v52 = vrot.slane %v36, 7
    %v53 = vrot.slane %v37, 7
    %v54 = vrot.slane %v38, 7
    %v55 = vrot.slane %v39, 7
    %v56 = vrot.slane %v40, 7
    %v57 = vrot.slane %v41, 7
    %v58 = vrot.slane %v42, 7
    %v59 = vrot.slane %v43, 7
    %v60 = vlaneseq
    %v61 = vshrl.u32 %v60, 7
    %vm62 = vcmp.lt.s32.totalorder %v61, 1
    %v63 = vsel %vm62, %v58, %v59
    %v64 = vsel %vm62, %v57, %v58
    %v65 = vsel %vm62, %v56, %v57
    %v66 = vsel %vm62, %v55, %v56
    %v67 = vsel %vm62, %v54, %v55
    %v68 = vsel %vm62, %v53, %v54
    %v69 = vsel %vm62, %v52, %v53
    %v70 = vsel %vm62, %v51, %v52
    %v71 = vsel %vm62, %v50, %v51
    %v72 = vsel %vm62, %v49, %v50
    %v73 = vsel %vm62, %v48, %v49
    %v74 = vsel %vm62, %v47, %v48
    %v75 = vsel %vm62, %v46, %v47
    %v76 = vsel %vm62, %v45, %v46
    %v77 = vsel %vm62, %v44, %v45
    %v78 = vsel %vm62, %v59, %v44
    %79 = vst [vmem:[#allocation5] sm:$0xff] %v78
    %80 = vst [vmem:[#allocation5 + $0x8] sm:$0xff] %v77
    %81 = vst [vmem:[#allocation5 + $0x10] sm:$0xff] %v76
    %82 = vst [vmem:[#allocation5 + $0x18] sm:$0xff] %v75
    %83 = vst [vmem:[#allocation5 + $0x20] sm:$0xff] %v74
    %84 = vst [vmem:[#allocation5 + $0x28] sm:$0xff] %v73
    %85 = vst [vmem:[#allocation5 + $0x30] sm:$0xff] %v72
    %86 = vst [vmem:[#allocation5 + $0x38] sm:$0xff] %v71
    %87 = vst [vmem:[#allocation5 + $0x40] sm:$0xff] %v70
    %88 = vst [vmem:[#allocation5 + $0x48] sm:$0xff] %v69
    %89 = vst [vmem:[#allocation5 + $0x50] sm:$0xff] %v68
    %90 = vst [vmem:[#allocation5 + $0x58] sm:$0xff] %v67
    %91 = vst [vmem:[#allocation5 + $0x60] sm:$0xff] %v66
    %92 = vst [vmem:[#allocation5 + $0x68] sm:$0xff] %v65
    %93 = vst [vmem:[#allocation5 + $0x70] sm:$0xff] %v64
    %94 = vst [vmem:[#allocation5 + $0x78] sm:$0xff] %v63
    %v95 = vld [vmem:[#allocation2] sm:$0xff]
    %v96 = vld [vmem:[#allocation2 + $0x8] sm:$0xff]
    %v97 = vld [vmem:[#allocation2 + $0x10] sm:$0xff]
    %v98 = vld [vmem:[#allocation2 + $0x18] sm:$0xff]
    %v99 = vld [vmem:[#allocation2 + $0x20] sm:$0xff]
    %v100 = vld [vmem:[#allocation2 + $0x28] sm:$0xff]
    %v101 = vld [vmem:[#allocation2 + $0x30] sm:$0xff]
    %v102 = vld [vmem:[#allocation2 + $0x38] sm:$0xff]
    %v103 = vld [vmem:[#allocation2 + $0x40] sm:$0xff]
    %v104 = vld [vmem:[#allocation2 + $0x48] sm:$0xff]
    %v105 = vld [vmem:[#allocation2 + $0x50] sm:$0xff]
    %v106 = vld [vmem:[#allocation2 + $0x58] sm:$0xff]
    %v107 = vld [vmem:[#allocation2 + $0x60] sm:$0xff]
    %v108 = vld [vmem:[#allocation2 + $0x68] sm:$0xff]
    %v109 = vld [vmem:[#allocation2 + $0x70] sm:$0xff]
    %v110 = vld [vmem:[#allocation2 + $0x78] sm:$0xff]
    %v111 = vrot.slane %v95, 1
    %v112 = vrot.slane %v96, 1
    %v113 = vrot.slane %v97, 1
    %v114 = vrot.slane %v98, 1
    %v115 = vrot.slane %v99, 1
    %v116 = vrot.slane %v100, 1
    %v117 = vrot.slane %v101, 1
    %v118 = vrot.slane %v102, 1
    %v119 = vrot.slane %v103, 1
    %v120 = vrot.slane %v104, 1
    %v121 = vrot.slane %v105, 1
    %v122 = vrot.slane %v106, 1
    %v123 = vrot.slane %v107, 1
    %v124 = vrot.slane %v108, 1
    %v125 = vrot.slane %v109, 1
    %v126 = vrot.slane %v110, 1
    %vm127 = vcmp.lt.s32.totalorder %v61, 7
    %v128 = vsel %vm127, %v125, %v126
    %v129 = vsel %vm127, %v124, %v125
    %v130 = vsel %vm127, %v123, %v124
    %v131 = vsel %vm127, %v122, %v123
    %v132 = vsel %vm127, %v121, %v122
    %v133 = vsel %vm127, %v120, %v121
    %v134 = vsel %vm127, %v119, %v120
    %v135 = vsel %vm127, %v118, %v119
    %v136 = vsel %vm127, %v117, %v118
    %v137 = vsel %vm127, %v116, %v117
    %v138 = vsel %vm127, %v115, %v116
    %v139 = vsel %vm127, %v114, %v115
    %v140 = vsel %vm127, %v113, %v114
    %v141 = vsel %vm127, %v112, %v113
    %v142 = vsel %vm127, %v111, %v112
    %v143 = vsel %vm127, %v126, %v111
    %144 = vst [vmem:[#allocation6] sm:$0xff] %v142
    %145 = vst [vmem:[#allocation6 + $0x8] sm:$0xff] %v141
    %146 = vst [vmem:[#allocation6 + $0x10] sm:$0xff] %v140
    %147 = vst [vmem:[#allocation6 + $0x18] sm:$0xff] %v139
    %148 = vst [vmem:[#allocation6 + $0x20] sm:$0xff] %v138
    %149 = vst [vmem:[#allocation6 + $0x28] sm:$0xff] %v137
    %150 = vst [vmem:[#allocation6 + $0x30] sm:$0xff] %v136
    %151 = vst [vmem:[#allocation6 + $0x38] sm:$0xff] %v135
    %152 = vst [vmem:[#allocation6 + $0x40] sm:$0xff] %v134
    %153 = vst [vmem:[#allocation6 + $0x48] sm:$0xff] %v133
    %154 = vst [vmem:[#allocation6 + $0x50] sm:$0xff] %v132
    %155 = vst [vmem:[#allocation6 + $0x58] sm:$0xff] %v131
    %156 = vst [vmem:[#allocation6 + $0x60] sm:$0xff] %v130
    %157 = vst [vmem:[#allocation6 + $0x68] sm:$0xff] %v129
    %158 = vst [vmem:[#allocation6 + $0x70] sm:$0xff] %v128
    %159 = vst [vmem:[#allocation6 + $0x78] sm:$0xff] %v143
    // Predicated region
    $region10: #{tpu_custom_call.1} parent=1 // pred_check
      _
    $region11: #{tpu_custom_call.1} parent=1 // pred_check_branch
      %161 = sbr.rel (0) target = $region13
    $region12: #{tpu_custom_call.1} parent=1 // pred_region
      %163 = vsyncadd [#allocation4], 0
      %s164 = sshll.u32 [#allocation5], 4
      %s165 = int_to_ptr.vmem [resolvable:$true] %s164
      %s166 = sshll.u32 %s1, 4
      %s167 = int_to_ptr.hbm [resolvable:$true] %s166
      %172 = dma.vmem_to_hbm [thread:$0]  %s165, 2048, %s167, [#allocation4], 128, 128, 8
    $region13: #{tpu_custom_call.1} parent=1 // pred_fallthru
      _
    // Predicated region
    $region14: #{tpu_custom_call.1} parent=1 // pred_check
      _
    $region15: #{tpu_custom_call.1} parent=1 // pred_check_branch
      %174 = sbr.rel (0) target = $region17
    $region16: #{tpu_custom_call.1} parent=1 // pred_region
      %176 = vsyncadd [#allocation7], 0
      %s177 = sshll.u32 [#allocation6], 4
      %s178 = int_to_ptr.vmem [resolvable:$true] %s177
      %s179 = sshll.u32 %s2, 4
      %s180 = int_to_ptr.hbm [resolvable:$true] %s179
      %185 = dma.vmem_to_hbm [thread:$0]  %s178, 2048, %s180, [#allocation7], 128, 128, 8
    $region17: #{tpu_custom_call.1} parent=1 // pred_fallthru
      _
    // Predicated region
    $region18: #{tpu_custom_call.1} parent=1 // pred_check
      _
    $region19: #{tpu_custom_call.1} parent=1 // pred_check_branch
      %187 = sbr.rel (0) target = $region21
    $region20: #{tpu_custom_call.1} parent=1 // pred_region
      %189 = dma.done [#allocation4], 2048
    $region21: #{tpu_custom_call.1} parent=1 // pred_fallthru
      _
    // Predicated region
    $region22: #{tpu_custom_call.1} parent=1 // pred_check
      _
    $region23: #{tpu_custom_call.1} parent=1 // pred_check_branch
      %191 = sbr.rel (0) target = $region25
    $region24: #{tpu_custom_call.1} parent=1 // pred_region
      %193 = dma.done [#allocation7], 2048
    $region25: #{tpu_custom_call.1} parent=1 // pred_fallthru
      _
    %194 = vsyncpa [#allocation3], 1
    %195 = vsyncpa [#allocation4], 1
    %196 = vsyncpa [#allocation7], 1

// kernel: tpu_custom_call.1
$region0: #{tpu_custom_call.1}
  #allocation0 [shape = 'u32[]', space=smem, size = 0x4, offset = 0x4, fixed_abs, tag = 'smem constant byte address 0x4 - core index']
  #allocation1 [shape = 'u32[72,128]{1,0:T(1,128)}', space=vmem, size = 0x9000, scoped, tag = 'internal scratch']
  %s0 = inlined_call_operand.hbm [shape: bf16[8,16,32], index: 0, kind: input, shape index: {}]
  %s1 = inlined_call_operand.hbm [shape: bf16[2,32,256], index: 1, kind: input, shape index: {}]
  %s2 = inlined_call_operand.vmem [shape: f32[1,128], index: 2, kind: input, shape index: {}]
  %s3 = inlined_call_operand.hbm [shape: f32[16,128], index: 3, kind: input, shape index: {}]
  %s4 = inlined_call_operand.hbm [shape: f32[128,128], index: 4, kind: input, shape index: {}]
  %s5 = inlined_call_operand.vmem [shape: f32[1,128], index: 5, kind: input, shape index: {}]
  %s6 = inlined_call_operand.hbm [shape: f32[8,128], index: 6, kind: output, shape index: {}]
  %s7 = sld [smem:[#allocation0]]
  $region50: #{tpu_custom_call.1} parent=0
    _
  %s9 = ssub.s32 1, %s7
  %s10 = scalar_select 0, %s9, %s7
  $region1: #{tpu_custom_call.1} parent=0
    #allocation2 [shape = 'u8[32768]{0}', space=vmem, size = 0x8000, scoped, tag = 'input window, operand 0, single buffered']
    #allocation3 [shape = 's32[1]{0}', space=sflag, size = 0x4, scoped, tag = 'scoped memory for tpu_custom_call.1']
    #allocation4 [shape = 's32[1]{0}', space=sflag, size = 0x4, scoped, tag = 'scoped memory for tpu_custom_call.1']
    #allocation5 [shape = 'u8[32768]{0}', space=vmem, size = 0x8000, scoped, tag = 'input window, operand 1, single buffered']
    #allocation6 [shape = 's32[1]{0}', space=sflag, size = 0x4, scoped, tag = 'scoped memory for tpu_custom_call.1']
    #allocation7 [shape = 'u8[8192]{0}', space=vmem, size = 0x2000, scoped, tag = 'input window, operand 3, single buffered']
    #allocation8 [shape = 'u8[65536]{0}', space=vmem, size = 0x10000, scoped, tag = 'input window, operand 4, single buffered']
    #allocation9 [shape = 's32[1]{0}', space=sflag, size = 0x4, scoped, tag = 'scoped memory for tpu_custom_call.1']
    #allocation10 [shape = 'u8[4096]{0}', space=vmem, size = 0x1000, scoped, tag = 'output window, operand 0, single buffered']
    %11 = vsyncpa [#allocation3], 0
    %12 = vsyncpa [#allocation6], 0
    %13 = vsyncpa [#allocation9], 0
    %14 = vsyncpa [#allocation4], 0
    // Predicated region
    $region2: #{tpu_custom_call.1} parent=1 // pred_check
      _
    $region3: #{tpu_custom_call.1} parent=1 // pred_check_branch
      %16 = sbr.rel (0) target = $region5
    $region4: #{tpu_custom_call.1} parent=1 // pred_region
      %18 = vsyncadd [#allocation3], 0
      %s19 = sshll.u32 %s0, 4
      %s20 = int_to_ptr.hbm [resolvable:$true] %s19
      %s21 = sshll.u32 [#allocation2], 4
      %s22 = int_to_ptr.vmem [resolvable:$true] %s21
      %27 = dma.hbm_to_vmem [thread:$0]  %s20, 1024, %s22, [#allocation3], 64, 64, 4
    $region5: #{tpu_custom_call.1} parent=1 // pred_fallthru
      _
    // Predicated region
    $region6: #{tpu_custom_call.1} parent=1 // pred_check
      _
    $region7: #{tpu_custom_call.1} parent=1 // pred_check_branch
      %29 = sbr.rel (0) target = $region9
    $region8: #{tpu_custom_call.1} parent=1 // pred_region
      %31 = vsyncadd [#allocation6], 0
      %s32 = sshll.u32 %s1, 4
      %s33 = int_to_ptr.hbm [resolvable:$true] %s32
      %s34 = sshll.u32 [#allocation5], 4
      %s35 = int_to_ptr.vmem [resolvable:$true] %s34
      %40 = dma.hbm_to_vmem [thread:$0]  %s33, 1024, %s35, [#allocation6], 128, 128, 8
    $region9: #{tpu_custom_call.1} parent=1 // pred_fallthru
      _
    // Predicated region
    $region10: #{tpu_custom_call.1} parent=1 // pred_check
      _
    $region11: #{tpu_custom_call.1} parent=1 // pred_check_branch
      %42 = sbr.rel (0) target = $region13
    $region12: #{tpu_custom_call.1} parent=1 // pred_region
      _
    $region13: #{tpu_custom_call.1} parent=1 // pred_fallthru
      _
    // Predicated region
    $region14: #{tpu_custom_call.1} parent=1 // pred_check
      _
    $region15: #{tpu_custom_call.1} parent=1 // pred_check_branch
      %44 = sbr.rel (0) target = $region17
    $region16: #{tpu_custom_call.1} parent=1 // pred_region
      %46 = vsyncadd [#allocation6], 0
      %s47 = sshll.u32 %s3, 4
      %s48 = int_to_ptr.hbm [resolvable:$true] %s47
      %s49 = sshll.u32 [#allocation7], 4
      %s50 = int_to_ptr.vmem [resolvable:$true] %s49
      %55 = dma.hbm_to_vmem [thread:$0]  %s48, 256, %s50, [#allocation6], 128, 128, 8
    $region17: #{tpu_custom_call.1} parent=1 // pred_fallthru
      _
    // Predicated region
    $region18: #{tpu_custom_call.1} parent=1 // pred_check
      _
    $region19: #{tpu_custom_call.1} parent=1 // pred_check_branch
      %57 = sbr.rel (0) target = $region21
    $region20: #{tpu_custom_call.1} parent=1 // pred_region
      %59 = vsyncadd [#allocation9], 0
      %s60 = sshll.u32 %s4, 4
      %s61 = int_to_ptr.hbm [resolvable:$true] %s60
      %s62 = sshll.u32 [#allocation8], 4
      %s63 = int_to_ptr.vmem [resolvable:$true] %s62
      %68 = dma.hbm_to_vmem [thread:$0]  %s61, 2048, %s63, [#allocation9], 128, 128, 8
    $region21: #{tpu_custom_call.1} parent=1 // pred_fallthru
      _
    // Predicated region
    $region22: #{tpu_custom_call.1} parent=1 // pred_check
      _
    $region23: #{tpu_custom_call.1} parent=1 // pred_check_branch
      %70 = sbr.rel (0) target = $region25
    $region24: #{tpu_custom_call.1} parent=1 // pred_region
      _
    $region25: #{tpu_custom_call.1} parent=1 // pred_fallthru
      _
    // Predicated region
    $region26: #{tpu_custom_call.1} parent=1 // pred_check
      _
    $region27: #{tpu_custom_call.1} parent=1 // pred_check_branch
      %72 = sbr.rel (0) target = $region29
    $region28: #{tpu_custom_call.1} parent=1 // pred_region
      %74 = dma.done [#allocation3], 1024
    $region29: #{tpu_custom_call.1} parent=1 // pred_fallthru
      _
    // Predicated region
    $region30: #{tpu_custom_call.1} parent=1 // pred_check
      _
    $region31: #{tpu_custom_call.1} parent=1 // pred_check_branch
      %76 = sbr.rel (0) target = $region33
    $region32: #{tpu_custom_call.1} parent=1 // pred_region
      %78 = dma.done [#allocation6], 1024
    $region33: #{tpu_custom_call.1} parent=1 // pred_fallthru
      _
    // Predicated region
    $region34: #{tpu_custom_call.1} parent=1 // pred_check
      _
    $region35: #{tpu_custom_call.1} parent=1 // pred_check_branch
      %80 = sbr.rel (0) target = $region37
    $region36: #{tpu_custom_call.1} parent=1 // pred_region
      %82 = dma.done [#allocation6], 256
    $region37: #{tpu_custom_call.1} parent=1 // pred_fallthru
      _
    // Predicated region
    $region38: #{tpu_custom_call.1} parent=1 // pred_check
      _
    $region39: #{tpu_custom_call.1} parent=1 // pred_check_branch
      %84 = sbr.rel (0) target = $region41
    $region40: #{tpu_custom_call.1} parent=1 // pred_region
      %86 = dma.done [#allocation9], 2048
    $region41: #{tpu_custom_call.1} parent=1 // pred_fallthru
      _
    %v88 = vld [vmem:[#allocation2] sm:$0xf]
    %v89 = vld [vmem:[#allocation2 + $0x4] sm:$0xf]
    %v90 = vld [vmem:[#allocation2 + $0x8] sm:$0xf]
    %v91 = vld [vmem:[#allocation2 + $0xc] sm:$0xf]
    %v92 = vld [vmem:[#allocation2 + $0x10] sm:$0xf]
    %v93 = vld [vmem:[#allocation2 + $0x14] sm:$0xf]
    %v94 = vld [vmem:[#allocation2 + $0x18] sm:$0xf]
    %v95 = vld [vmem:[#allocation2 + $0x1c] sm:$0xf]
    %v96 = vld [vmem:[#allocation2 + $0x20] sm:$0xf]
    %v97 = vld [vmem:[#allocation2 + $0x24] sm:$0xf]
    %v98 = vld [vmem:[#allocation2 + $0x28] sm:$0xf]
    %v99 = vld [vmem:[#allocation2 + $0x2c] sm:$0xf]
    %v100 = vld [vmem:[#allocation2 + $0x30] sm:$0xf]
    %v101 = vld [vmem:[#allocation2 + $0x34] sm:$0xf]
    %v102 = vld [vmem:[#allocation2 + $0x38] sm:$0xf]
    %v103 = vld [vmem:[#allocation2 + $0x3c] sm:$0xf]
    %v104 = vld [vmem:[#allocation5] sm:$0xff]
    %v105 = vld [vmem:[#allocation5 + $0x8] sm:$0xff]
    %v106 = vld [vmem:[#allocation5 + $0x10] sm:$0xff]
    %v107 = vld [vmem:[#allocation5 + $0x18] sm:$0xff]
    %v124 = vunpack.c.l.b16 %v88
    %v125 = vunpack.c.l.b16 %v89
    %v126 = vunpack.c.l.b16 %v90
    %v127 = vunpack.c.l.b16 %v91
    %v128 = vunpack.c.l.b16 %v92
    %v129 = vunpack.c.l.b16 %v93
    %v130 = vunpack.c.l.b16 %v94
    %v131 = vunpack.c.l.b16 %v95
    %v132 = vunpack.c.l.b16 %v96
    %v133 = vunpack.c.l.b16 %v97
    %v134 = vunpack.c.l.b16 %v98
    %v135 = vunpack.c.l.b16 %v99
    %v136 = vunpack.c.l.b16 %v100
    %v137 = vunpack.c.l.b16 %v101
    %v138 = vunpack.c.l.b16 %v102
    %v139 = vunpack.c.l.b16 %v103
    %v140 = vpack.c.b16 %v125, %v124
    %v141 = vpack.c.b16 %v127, %v126
    %v142 = vpack.c.b16 %v129, %v128
    %v143 = vpack.c.b16 %v131, %v130
    %v144 = vpack.c.b16 %v133, %v132
    %v145 = vpack.c.b16 %v135, %v134
    %v146 = vpack.c.b16 %v137, %v136
    %v147 = vpack.c.b16 %v139, %v138
    %v152 = vunpack.c.l.b16 %v104
    %v153 = vunpack.c.h.b16 %v104
    %v154 = vunpack.c.l.b16 %v105
    %v155 = vunpack.c.h.b16 %v105
    %v156 = vunpack.c.l.b16 %v106
    %v157 = vunpack.c.h.b16 %v106
    %v158 = vunpack.c.l.b16 %v107
    %v159 = vunpack.c.h.b16 %v107
    %v160 = vpack.c.b16 %v154, %v152
    %v161 = vpack.c.b16 %v155, %v153
    %v162 = vpack.c.b16 %v158, %v156
    %v163 = vpack.c.b16 %v159, %v157
    %vm168 = vcmask 261120
    %v170 = vsel %vm168, %v140, 0
    %v173 = vsel %vm168, %v141, 0
    %v176 = vsel %vm168, %v142, 0
    %v179 = vsel %vm168, %v143, 0
    %v182 = vsel %vm168, %v144, 0
    %v185 = vsel %vm168, %v145, 0
    %v188 = vsel %vm168, %v146, 0
    %v191 = vsel %vm168, %v147, 0
    %193 = vmatpush.bf16.msra.mxu0 0
    %194 = vmatpush.bf16.msra.mxu0 0
    %195 = vmatpush.bf16.msra.mxu0 0
    %196 = vmatpush.bf16.msra.mxu0 0
    %197 = vmatpush.bf16.msra.mxu0 0
    %198 = vmatpush.bf16.msra.mxu0 0
    %199 = vmatpush.bf16.msra.mxu0 %v162
    %200 = vmatpush.bf16.msra.mxu0 %v160
    %201 = vmatmul.bf16.gmra.mxu0 %v170
    %v202 = vpop.f32.mrf.mxu0
    %v203 = vadd.f32 0.0, %v202
    %v204 = vpop.f32.mrf.mxu0
    %v205 = vadd.f32 0.0, %v204
    %206 = vmatmul.bf16.gmra.mxu0 %v173
    %v207 = vpop.f32.mrf.mxu0
    %v208 = vadd.f32 0.0, %v207
    %v209 = vpop.f32.mrf.mxu0
    %v210 = vadd.f32 0.0, %v209
    %211 = vmatmul.bf16.gmra.mxu0 %v176
    %v212 = vpop.f32.mrf.mxu0
    %v213 = vadd.f32 0.0, %v212
    %v214 = vpop.f32.mrf.mxu0
    %v215 = vadd.f32 0.0, %v214
    %216 = vmatmul.bf16.gmra.mxu0 %v179
    %v217 = vpop.f32.mrf.mxu0
    %v218 = vadd.f32 0.0, %v217
    %v219 = vpop.f32.mrf.mxu0
    %v220 = vadd.f32 0.0, %v219
    %221 = vmatmul.bf16.gmra.mxu0 %v182
    %v222 = vpop.f32.mrf.mxu0
    %v223 = vadd.f32 0.0, %v222
    %v224 = vpop.f32.mrf.mxu0
    %v225 = vadd.f32 0.0, %v224
    %226 = vmatmul.bf16.gmra.mxu0 %v185
    %v227 = vpop.f32.mrf.mxu0
    %v228 = vadd.f32 0.0, %v227
    %v229 = vpop.f32.mrf.mxu0
    %v230 = vadd.f32 0.0, %v229
    %231 = vmatmul.bf16.gmra.mxu0 %v188
    %v232 = vpop.f32.mrf.mxu0
    %v233 = vadd.f32 0.0, %v232
    %v234 = vpop.f32.mrf.mxu0
    %v235 = vadd.f32 0.0, %v234
    %236 = vmatmul.bf16.gmra.mxu0 %v191
    %v237 = vpop.f32.mrf.mxu0
    %v238 = vadd.f32 0.0, %v237
    %v239 = vpop.f32.mrf.mxu0
    %v240 = vadd.f32 0.0, %v239
    %241 = vdwg.mxu0
    %242 = vmatpush.bf16.msra.mxu0 0
    %243 = vmatpush.bf16.msra.mxu0 0
    %244 = vmatpush.bf16.msra.mxu0 0
    %245 = vmatpush.bf16.msra.mxu0 0
    %246 = vmatpush.bf16.msra.mxu0 0
    %247 = vmatpush.bf16.msra.mxu0 0
    %248 = vmatpush.bf16.msra.mxu0 %v163
    %249 = vmatpush.bf16.msra.mxu0 %v161
    %250 = vmatmul.bf16.gmra.mxu0 %v170
    %v251 = vpop.f32.mrf.mxu0
    %v252 = vadd.f32 0.0, %v251
    %v253 = vpop.f32.mrf.mxu0
    %v254 = vadd.f32 0.0, %v253
    %255 = vmatmul.bf16.gmra.mxu0 %v173
    %v256 = vpop.f32.mrf.mxu0
    %v257 = vadd.f32 0.0, %v256
    %v258 = vpop.f32.mrf.mxu0
    %v259 = vadd.f32 0.0, %v258
    %260 = vmatmul.bf16.gmra.mxu0 %v176
    %v261 = vpop.f32.mrf.mxu0
    %v262 = vadd.f32 0.0, %v261
    %v263 = vpop.f32.mrf.mxu0
    %v264 = vadd.f32 0.0, %v263
    %265 = vmatmul.bf16.gmra.mxu0 %v179
    %v266 = vpop.f32.mrf.mxu0
    %v267 = vadd.f32 0.0, %v266
    %v268 = vpop.f32.mrf.mxu0
    %v269 = vadd.f32 0.0, %v268
    %270 = vmatmul.bf16.gmra.mxu0 %v182
    %v271 = vpop.f32.mrf.mxu0
    %v272 = vadd.f32 0.0, %v271
    %v273 = vpop.f32.mrf.mxu0
    %v274 = vadd.f32 0.0, %v273
    %275 = vmatmul.bf16.gmra.mxu0 %v185
    %v276 = vpop.f32.mrf.mxu0
    %v277 = vadd.f32 0.0, %v276
    %v278 = vpop.f32.mrf.mxu0
    %v279 = vadd.f32 0.0, %v278
    %280 = vmatmul.bf16.gmra.mxu0 %v188
    %v281 = vpop.f32.mrf.mxu0
    %v282 = vadd.f32 0.0, %v281
    %v283 = vpop.f32.mrf.mxu0
    %v284 = vadd.f32 0.0, %v283
    %285 = vmatmul.bf16.gmra.mxu0 %v191
    %v286 = vpop.f32.mrf.mxu0
    %v287 = vadd.f32 0.0, %v286
    %v288 = vpop.f32.mrf.mxu0
    %v289 = vadd.f32 0.0, %v288
    %290 = vdwg.mxu0
    %v291 = vld [vmem:[%s2] sm:$0x1]
    %v293 = vperm.slane %v291, 0
    %v295 = vadd.f32 %v203, %v293
    %v296 = vadd.f32 %v205, %v293
    %v297 = vadd.f32 %v208, %v293
    %v298 = vadd.f32 %v210, %v293
    %v299 = vadd.f32 %v213, %v293
    %v300 = vadd.f32 %v215, %v293
    %v301 = vadd.f32 %v218, %v293
    %v302 = vadd.f32 %v220, %v293
    %v303 = vadd.f32 %v223, %v293
    %v304 = vadd.f32 %v225, %v293
    %v305 = vadd.f32 %v228, %v293
    %v306 = vadd.f32 %v230, %v293
    %v307 = vadd.f32 %v233, %v293
    %v308 = vadd.f32 %v235, %v293
    %v309 = vadd.f32 %v238, %v293
    %v310 = vadd.f32 %v240, %v293
    %vm327 = vcmask 1046528
    %v328 = vrot.slane %v252, 1
    %v329 = vrot.slane %v254, 1
    %v330 = vsel %vm327, %v328, %v329
    %v331 = vrot.slane %v257, 1
    %v332 = vsel %vm327, %v329, %v331
    %v333 = vrot.slane %v259, 1
    %v334 = vsel %vm327, %v331, %v333
    %v335 = vrot.slane %v262, 1
    %v336 = vsel %vm327, %v333, %v335
    %v337 = vrot.slane %v264, 1
    %v338 = vsel %vm327, %v335, %v337
    %v339 = vrot.slane %v267, 1
    %v340 = vsel %vm327, %v337, %v339
    %v341 = vrot.slane %v269, 1
    %v342 = vsel %vm327, %v339, %v341
    %v343 = vrot.slane %v272, 1
    %v344 = vsel %vm327, %v341, %v343
    %v345 = vrot.slane %v274, 1
    %v346 = vsel %vm327, %v343, %v345
    %v347 = vrot.slane %v277, 1
    %v348 = vsel %vm327, %v345, %v347
    %v349 = vrot.slane %v279, 1
    %v350 = vsel %vm327, %v347, %v349
    %v351 = vrot.slane %v282, 1
    %v352 = vsel %vm327, %v349, %v351
    %v353 = vrot.slane %v284, 1
    %v354 = vsel %vm327, %v351, %v353
    %v355 = vrot.slane %v287, 1
    %v356 = vsel %vm327, %v353, %v355
    %v357 = vrot.slane %v289, 1
    %v358 = vsel %vm327, %v355, %v357
    %v375 = vsel %vm327, %v357, 0.0
    %v376 = vadd.f32 %v295, %v330
    %v377 = vadd.f32 %v296, %v332
    %v378 = vadd.f32 %v297, %v334
    %v379 = vadd.f32 %v298, %v336
    %v380 = vadd.f32 %v299, %v338
    %v381 = vadd.f32 %v300, %v340
    %v382 = vadd.f32 %v301, %v342
    %v383 = vadd.f32 %v302, %v344
    %v384 = vadd.f32 %v303, %v346
    %v385 = vadd.f32 %v304, %v348
    %v386 = vadd.f32 %v305, %v350
    %v387 = vadd.f32 %v306, %v352
    %v388 = vadd.f32 %v307, %v354
    %v389 = vadd.f32 %v308, %v356
    %v390 = vadd.f32 %v309, %v358
    %v391 = vadd.f32 %v310, %v375
    %s392 = scalar_lea.vmem [#allocation5], 32
    %v393 = vld [vmem:[%s392] sm:$0xff]
    %v394 = vld [vmem:[%s392 + $0x8] sm:$0xff]
    %v395 = vld [vmem:[%s392 + $0x10] sm:$0xff]
    %v396 = vld [vmem:[%s392 + $0x18] sm:$0xff]
    %v401 = vunpack.c.l.b16 %v393
    %v402 = vunpack.c.h.b16 %v393
    %v403 = vunpack.c.l.b16 %v394
    %v404 = vunpack.c.h.b16 %v394
    %v405 = vunpack.c.l.b16 %v395
    %v406 = vunpack.c.h.b16 %v395
    %v407 = vunpack.c.l.b16 %v396
    %v408 = vunpack.c.h.b16 %v396
    %v409 = vpack.c.b16 %v403, %v401
    %v410 = vpack.c.b16 %v404, %v402
    %v411 = vpack.c.b16 %v407, %v405
    %v412 = vpack.c.b16 %v408, %v406
    %417 = vmatpush.bf16.msra.mxu0 0
    %418 = vmatpush.bf16.msra.mxu0 0
    %419 = vmatpush.bf16.msra.mxu0 0
    %420 = vmatpush.bf16.msra.mxu0 0
    %421 = vmatpush.bf16.msra.mxu0 0
    %422 = vmatpush.bf16.msra.mxu0 0
    %423 = vmatpush.bf16.msra.mxu0 %v411
    %424 = vmatpush.bf16.msra.mxu0 %v409
    %425 = vmatmul.bf16.gmra.mxu0 %v170
    %v426 = vpop.f32.mrf.mxu0
    %v427 = vadd.f32 0.0, %v426
    %v428 = vpop.f32.mrf.mxu0
    %v429 = vadd.f32 0.0, %v428
    %430 = vmatmul.bf16.gmra.mxu0 %v173
    %v431 = vpop.f32.mrf.mxu0
    %v432 = vadd.f32 0.0, %v431
    %v433 = vpop.f32.mrf.mxu0
    %v434 = vadd.f32 0.0, %v433
    %435 = vmatmul.bf16.gmra.mxu0 %v176
    %v436 = vpop.f32.mrf.mxu0
    %v437 = vadd.f32 0.0, %v436
    %v438 = vpop.f32.mrf.mxu0
    %v439 = vadd.f32 0.0, %v438
    %440 = vmatmul.bf16.gmra.mxu0 %v179
    %v441 = vpop.f32.mrf.mxu0
    %v442 = vadd.f32 0.0, %v441
    %v443 = vpop.f32.mrf.mxu0
    %v444 = vadd.f32 0.0, %v443
    %445 = vmatmul.bf16.gmra.mxu0 %v182
    %v446 = vpop.f32.mrf.mxu0
    %v447 = vadd.f32 0.0, %v446
    %v448 = vpop.f32.mrf.mxu0
    %v449 = vadd.f32 0.0, %v448
    %450 = vmatmul.bf16.gmra.mxu0 %v185
    %v451 = vpop.f32.mrf.mxu0
    %v452 = vadd.f32 0.0, %v451
    %v453 = vpop.f32.mrf.mxu0
    %v454 = vadd.f32 0.0, %v453
    %455 = vmatmul.bf16.gmra.mxu0 %v188
    %v456 = vpop.f32.mrf.mxu0
    %v457 = vadd.f32 0.0, %v456
    %v458 = vpop.f32.mrf.mxu0
    %v459 = vadd.f32 0.0, %v458
    %460 = vmatmul.bf16.gmra.mxu0 %v191
    %v461 = vpop.f32.mrf.mxu0
    %v462 = vadd.f32 0.0, %v461
    %v463 = vpop.f32.mrf.mxu0
    %v464 = vadd.f32 0.0, %v463
    %465 = vdwg.mxu0
    %466 = vmatpush.bf16.msra.mxu0 0
    %467 = vmatpush.bf16.msra.mxu0 0
    %468 = vmatpush.bf16.msra.mxu0 0
    %469 = vmatpush.bf16.msra.mxu0 0
    %470 = vmatpush.bf16.msra.mxu0 0
    %471 = vmatpush.bf16.msra.mxu0 0
    %472 = vmatpush.bf16.msra.mxu0 %v412
    %473 = vmatpush.bf16.msra.mxu0 %v410
    %474 = vmatmul.bf16.gmra.mxu0 %v170
    %v475 = vpop.f32.mrf.mxu0
    %v476 = vadd.f32 0.0, %v475
    %v477 = vpop.f32.mrf.mxu0
    %v478 = vadd.f32 0.0, %v477
    %479 = vmatmul.bf16.gmra.mxu0 %v173
    %v480 = vpop.f32.mrf.mxu0
    %v481 = vadd.f32 0.0, %v480
    %v482 = vpop.f32.mrf.mxu0
    %v483 = vadd.f32 0.0, %v482
    %484 = vmatmul.bf16.gmra.mxu0 %v176
    %v485 = vpop.f32.mrf.mxu0
    %v486 = vadd.f32 0.0, %v485
    %v487 = vpop.f32.mrf.mxu0
    %v488 = vadd.f32 0.0, %v487
    %489 = vmatmul.bf16.gmra.mxu0 %v179
    %v490 = vpop.f32.mrf.mxu0
    %v491 = vadd.f32 0.0, %v490
    %v492 = vpop.f32.mrf.mxu0
    %v493 = vadd.f32 0.0, %v492
    %494 = vmatmul.bf16.gmra.mxu0 %v182
    %v495 = vpop.f32.mrf.mxu0
    %v496 = vadd.f32 0.0, %v495
    %v497 = vpop.f32.mrf.mxu0
    %v498 = vadd.f32 0.0, %v497
    %499 = vmatmul.bf16.gmra.mxu0 %v185
    %v500 = vpop.f32.mrf.mxu0
    %v501 = vadd.f32 0.0, %v500
    %v502 = vpop.f32.mrf.mxu0
    %v503 = vadd.f32 0.0, %v502
    %504 = vmatmul.bf16.gmra.mxu0 %v188
    %v505 = vpop.f32.mrf.mxu0
    %v506 = vadd.f32 0.0, %v505
    %v507 = vpop.f32.mrf.mxu0
    %v508 = vadd.f32 0.0, %v507
    %509 = vmatmul.bf16.gmra.mxu0 %v191
    %v510 = vpop.f32.mrf.mxu0
    %v511 = vadd.f32 0.0, %v510
    %v512 = vpop.f32.mrf.mxu0
    %v513 = vadd.f32 0.0, %v512
    %514 = vdwg.mxu0
    %vm531 = vcmask 1045504
    %v532 = vrot.slane %v427, 2
    %v533 = vrot.slane %v429, 2
    %v534 = vsel %vm531, %v532, %v533
    %v535 = vrot.slane %v432, 2
    %v536 = vsel %vm531, %v533, %v535
    %v537 = vrot.slane %v434, 2
    %v538 = vsel %vm531, %v535, %v537
    %v539 = vrot.slane %v437, 2
    %v540 = vsel %vm531, %v537, %v539
    %v541 = vrot.slane %v439, 2
    %v542 = vsel %vm531, %v539, %v541
    %v543 = vrot.slane %v442, 2
    %v544 = vsel %vm531, %v541, %v543
    %v545 = vrot.slane %v444, 2
    %v546 = vsel %vm531, %v543, %v545
    %v547 = vrot.slane %v447, 2
    %v548 = vsel %vm531, %v545, %v547
    %v549 = vrot.slane %v449, 2
    %v550 = vsel %vm531, %v547, %v549
    %v551 = vrot.slane %v452, 2
    %v552 = vsel %vm531, %v549, %v551
    %v553 = vrot.slane %v454, 2
    %v554 = vsel %vm531, %v551, %v553
    %v555 = vrot.slane %v457, 2
    %v556 = vsel %vm531, %v553, %v555
    %v557 = vrot.slane %v459, 2
    %v558 = vsel %vm531, %v555, %v557
    %v559 = vrot.slane %v462, 2
    %v560 = vsel %vm531, %v557, %v559
    %v561 = vrot.slane %v464, 2
    %v562 = vsel %vm531, %v559, %v561
    %v579 = vsel %vm531, %v561, 0.0
    %v580 = vadd.f32 %v376, %v534
    %v581 = vadd.f32 %v377, %v536
    %v582 = vadd.f32 %v378, %v538
    %v583 = vadd.f32 %v379, %v540
    %v584 = vadd.f32 %v380, %v542
    %v585 = vadd.f32 %v381, %v544
    %v586 = vadd.f32 %v382, %v546
    %v587 = vadd.f32 %v383, %v548
    %v588 = vadd.f32 %v384, %v550
    %v589 = vadd.f32 %v385, %v552
    %v590 = vadd.f32 %v386, %v554
    %v591 = vadd.f32 %v387, %v556
    %v592 = vadd.f32 %v388, %v558
    %v593 = vadd.f32 %v389, %v560
    %v594 = vadd.f32 %v390, %v562
    %v595 = vadd.f32 %v391, %v579
    %vm612 = vcmask 1044480
    %v613 = vrot.slane %v476, 3
    %v614 = vrot.slane %v478, 3
    %v615 = vsel %vm612, %v613, %v614
    %v616 = vrot.slane %v481, 3
    %v617 = vsel %vm612, %v614, %v616
    %v618 = vrot.slane %v483, 3
    %v619 = vsel %vm612, %v616, %v618
    %v620 = vrot.slane %v486, 3
    %v621 = vsel %vm612, %v618, %v620
    %v622 = vrot.slane %v488, 3
    %v623 = vsel %vm612, %v620, %v622
    %v624 = vrot.slane %v491, 3
    %v625 = vsel %vm612, %v622, %v624
    %v626 = vrot.slane %v493, 3
    %v627 = vsel %vm612, %v624, %v626
    %v628 = vrot.slane %v496, 3
    %v629 = vsel %vm612, %v626, %v628
    %v630 = vrot.slane %v498, 3
    %v631 = vsel %vm612, %v628, %v630
    %v632 = vrot.slane %v501, 3
    %v633 = vsel %vm612, %v630, %v632
    %v634 = vrot.slane %v503, 3
    %v635 = vsel %vm612, %v632, %v634
    %v636 = vrot.slane %v506, 3
    %v637 = vsel %vm612, %v634, %v636
    %v638 = vrot.slane %v508, 3
    %v639 = vsel %vm612, %v636, %v638
    %v640 = vrot.slane %v511, 3
    %v641 = vsel %vm612, %v638, %v640
    %v642 = vrot.slane %v513, 3
    %v643 = vsel %vm612, %v640, %v642
    %v660 = vsel %vm612, %v642, 0.0
    %v661 = vadd.f32 %v580, %v615
    %v662 = vadd.f32 %v581, %v617
    %v663 = vadd.f32 %v582, %v619
    %v664 = vadd.f32 %v583, %v621
    %v665 = vadd.f32 %v584, %v623
    %v666 = vadd.f32 %v585, %v625
    %v667 = vadd.f32 %v586, %v627
    %v668 = vadd.f32 %v587, %v629
    %v669 = vadd.f32 %v588, %v631
    %v670 = vadd.f32 %v589, %v633
    %v671 = vadd.f32 %v590, %v635
    %v672 = vadd.f32 %v591, %v637
    %v673 = vadd.f32 %v592, %v639
    %v674 = vadd.f32 %v593, %v641
    %v675 = vadd.f32 %v594, %v643
    %v676 = vadd.f32 %v595, %v660
    %v677 = vmax.f32 %v661, 0.0
    %v678 = vmax.f32 %v662, 0.0
    %v679 = vmax.f32 %v663, 0.0
    %v680 = vmax.f32 %v664, 0.0
    %v681 = vmax.f32 %v665, 0.0
    %v682 = vmax.f32 %v666, 0.0
    %v683 = vmax.f32 %v667, 0.0
    %v684 = vmax.f32 %v668, 0.0
    %v685 = vmax.f32 %v669, 0.0
    %v686 = vmax.f32 %v670, 0.0
    %v687 = vmax.f32 %v671, 0.0
    %v688 = vmax.f32 %v672, 0.0
    %v689 = vmax.f32 %v673, 0.0
    %v690 = vmax.f32 %v674, 0.0
    %v691 = vmax.f32 %v675, 0.0
    %v692 = vmax.f32 %v676, 0.0
    %v693 = vld [vmem:[#allocation7] sm:$0xff]
    %v694 = vld [vmem:[#allocation7 + $0x8] sm:$0xff]
    %v695 = vmul.f32 %v677, %v693
    %v696 = vmul.f32 %v678, %v694
    %v697 = vmul.f32 %v679, %v693
    %v698 = vmul.f32 %v680, %v694
    %v699 = vmul.f32 %v681, %v693
    %v700 = vmul.f32 %v682, %v694
    %v701 = vmul.f32 %v683, %v693
    %v702 = vmul.f32 %v684, %v694
    %v703 = vmul.f32 %v685, %v693
    %v704 = vmul.f32 %v686, %v694
    %v705 = vmul.f32 %v687, %v693
    %v706 = vmul.f32 %v688, %v694
    %v707 = vmul.f32 %v689, %v693
    %v708 = vmul.f32 %v690, %v694
    %v709 = vmul.f32 %v691, %v693
    %v710 = vmul.f32 %v692, %v694
    %v711 = vmax.f32 %v695, %v696
    %v712 = vrot.slane %v711, 4
    %v713 = vmax.f32 %v711, %v712
    %v714 = vrot.slane %v713, 2
    %v715 = vmax.f32 %v713, %v714
    %v716 = vrot.slane %v715, 1
    %v717 = vmax.f32 %v715, %v716
    %v718 = vmax.f32 %v697, %v698
    %v719 = vrot.slane %v718, 4
    %v720 = vmax.f32 %v718, %v719
    %v721 = vrot.slane %v720, 2
    %v722 = vmax.f32 %v720, %v721
    %v723 = vrot.slane %v722, 1
    %v724 = vmax.f32 %v722, %v723
    %v725 = vmax.f32 %v699, %v700
    %v726 = vrot.slane %v725, 4
    %v727 = vmax.f32 %v725, %v726
    %v728 = vrot.slane %v727, 2
    %v729 = vmax.f32 %v727, %v728
    %v730 = vrot.slane %v729, 1
    %v731 = vmax.f32 %v729, %v730
    %v732 = vmax.f32 %v701, %v702
    %v733 = vrot.slane %v732, 4
    %v734 = vmax.f32 %v732, %v733
    %v735 = vrot.slane %v734, 2
    %v736 = vmax.f32 %v734, %v735
    %v737 = vrot.slane %v736, 1
    %v738 = vmax.f32 %v736, %v737
    %v739 = vmax.f32 %v703, %v704
    %v740 = vrot.slane %v739, 4
    %v741 = vmax.f32 %v739, %v740
    %v742 = vrot.slane %v741, 2
    %v743 = vmax.f32 %v741, %v742
    %v744 = vrot.slane %v743, 1
    %v745 = vmax.f32 %v743, %v744
    %v746 = vmax.f32 %v705, %v706
    %v747 = vrot.slane %v746, 4
    %v748 = vmax.f32 %v746, %v747
    %v749 = vrot.slane %v748, 2
    %v750 = vmax.f32 %v748, %v749
    %v751 = vrot.slane %v750, 1
    %v752 = vmax.f32 %v750, %v751
    %v753 = vmax.f32 %v707, %v708
    %v754 = vrot.slane %v753, 4
    %v755 = vmax.f32 %v753, %v754
    %v756 = vrot.slane %v755, 2
    %v757 = vmax.f32 %v755, %v756
    %v758 = vrot.slane %v757, 1
    %v759 = vmax.f32 %v757, %v758
    %v760 = vmax.f32 %v709, %v710
    %v761 = vrot.slane %v760, 4
    %v762 = vmax.f32 %v760, %v761
    %v763 = vrot.slane %v762, 2
    %v764 = vmax.f32 %v762, %v763
    %v765 = vrot.slane %v764, 1
    %v766 = vmax.f32 %v764, %v765
    %v767 = vld [vmem:[#allocation8] sm:$0xff]
    %v768 = vld [vmem:[#allocation8 + $0x8] sm:$0xff]
    %v769 = vld [vmem:[#allocation8 + $0x10] sm:$0xff]
    %v770 = vld [vmem:[#allocation8 + $0x18] sm:$0xff]
    %v771 = vld [vmem:[#allocation8 + $0x20] sm:$0xff]
    %v772 = vld [vmem:[#allocation8 + $0x28] sm:$0xff]
    %v773 = vld [vmem:[#allocation8 + $0x30] sm:$0xff]
    %v774 = vld [vmem:[#allocation8 + $0x38] sm:$0xff]
    %v775 = vld [vmem:[#allocation8 + $0x40] sm:$0xff]
    %v776 = vld [vmem:[#allocation8 + $0x48] sm:$0xff]
    %v777 = vld [vmem:[#allocation8 + $0x50] sm:$0xff]
    %v778 = vld [vmem:[#allocation8 + $0x58] sm:$0xff]
    %v779 = vld [vmem:[#allocation8 + $0x60] sm:$0xff]
    %v780 = vld [vmem:[#allocation8 + $0x68] sm:$0xff]
    %v781 = vld [vmem:[#allocation8 + $0x70] sm:$0xff]
    %v782 = vld [vmem:[#allocation8 + $0x78] sm:$0xff]
    %v783 = vld [vmem:[%s5] sm:$0x1]
    %v785 = vperm.slane %v783, 0
    %vm795 = vcmask 1041409
    %v796 = vsel %vm795, %v724, %v717
    %vm797 = vcmask 1042434
    %v798 = vsel %vm797, %v731, %v796
    %vm799 = vcmask 1043459
    %v800 = vsel %vm799, %v738, %v798
    %vm801 = vcmask 1044484
    %v802 = vsel %vm801, %v745, %v800
    %vm803 = vcmask 1045509
    %v804 = vsel %vm803, %v752, %v802
    %vm805 = vcmask 1046534
    %v806 = vsel %vm805, %v759, %v804
    %vm807 = vcmask 1047559
    %v808 = vsel %vm807, %v766, %v806
    %810 = vmatpush.msra.mxu0 %v782
    %811 = vmatpush.msra.mxu0 %v781
    %812 = vmatpush.msra.mxu0 %v780
    %813 = vmatpush.msra.mxu0 %v779
    %814 = vmatpush.msra.mxu0 %v778
    %815 = vmatpush.msra.mxu0 %v777
    %816 = vmatpush.msra.mxu0 %v776
    %817 = vmatpush.msra.mxu0 %v775
    %818 = vmatpush.msra.mxu0 %v774
    %819 = vmatpush.msra.mxu0 %v773
    %820 = vmatpush.msra.mxu0 %v772
    %821 = vmatpush.msra.mxu0 %v771
    %822 = vmatpush.msra.mxu0 %v770
    %823 = vmatpush.msra.mxu0 %v769
    %824 = vmatpush.msra.mxu0 %v768
    %825 = vmatpush.msra.mxu0 %v767
    %826 = vmatmul.f32.gmra.mxu0 %v808
    %v827 = vpop.f32.mrf.mxu0
    %v828 = vadd.f32 %v785, %v827
    %829 = vdwg.mxu0
    %830 = vst [vmem:[#allocation10] sm:$0xff] %v828
    // Predicated region
    $region42: #{tpu_custom_call.1} parent=1 // pred_check
      _
    $region43: #{tpu_custom_call.1} parent=1 // pred_check_branch
      %832 = sbr.rel (0) target = $region45
    $region44: #{tpu_custom_call.1} parent=1 // pred_region
      %834 = vsyncadd [#allocation4], 0
      %s836 = sshll.u32 [#allocation10], 4
      %s837 = int_to_ptr.vmem [resolvable:$true] %s836
      %s838 = sshll.u32 %s6, 4
      %s839 = int_to_ptr.hbm [resolvable:$true] %s838
      %841 = dma.vmem_to_hbm [thread:$0]  %s837, 128, %s839, [#allocation4]
    $region45: #{tpu_custom_call.1} parent=1 // pred_fallthru
      _
    // Predicated region
    $region46: #{tpu_custom_call.1} parent=1 // pred_check
      _
    $region47: #{tpu_custom_call.1} parent=1 // pred_check_branch
      %843 = sbr.rel (0) target = $region49
    $region48: #{tpu_custom_call.1} parent=1 // pred_region
      %845 = dma.done [#allocation4], 128
    $region49: #{tpu_custom_call.1} parent=1 // pred_fallthru
      _
    %846 = vsyncpa [#allocation3], 1
    %847 = vsyncpa [#allocation6], 1
    %848 = vsyncpa [#allocation9], 1
    %849 = vsyncpa [#allocation4], 1

</llo_original>
